<compile_context>
chip_gen: v5e
topology: v5e:2x2
jax: 0.10.0
libtpu: 0.0.40
codegen_flags: <defaults>
</compile_context>

<pallas_src>
import jax
import jax.numpy as jnp
from jax.experimental import pallas as pl
from jax.experimental.pallas import tpu as pltpu

STATE_SIZE = 16
HIDDEN = 64

# Packed-parameter slab layout: shape (HIDDEN, 128) float32.
#   cols [0, 16)   : W1  (64, 16)   -- fc1.weight, PyTorch (out, in) layout
#   col  16        : b1  (64,)      -- fc1.bias   (stored as a column)
#   col  17        : b2  (64,)      -- fc2.bias
#   col  18        : w3  (64,)      -- fc3.weight row, stored as a column
#   col  19        : b3  scalar     -- fc3.bias, replicated down the column
#   cols [64, 128) : W2  (64, 64)   -- fc2.weight
_COL_B1 = 16
_COL_B2 = 17
_COL_W3 = 18
_COL_B3 = 19
_COL_W2 = 64
_SLAB_W = 128


def baseline_mlp_kernel(p_ref, xT_ref, o_ref):
    # Static slices of the single packed parameter slab (one DMA for everything).
    w1 = p_ref[:, 0:STATE_SIZE]                  # (64, 16)
    b1 = p_ref[:, _COL_B1:_COL_B1 + 1]           # (64, 1)
    b2 = p_ref[:, _COL_B2:_COL_B2 + 1]           # (64, 1)
    w3 = p_ref[:, _COL_W3:_COL_W3 + 1]           # (64, 1)
    b3 = p_ref[0:1, _COL_B3:_COL_B3 + 1]         # (1, 1), broadcast along lanes
    w2 = p_ref[:, _COL_W2:_COL_W2 + HIDDEN]      # (64, 64)

    xT = xT_ref[...]                             # (16, tile_b), batch on lanes

    # fc1 + relu (MXU matmul, bias broadcast along lanes)
    h1 = jnp.maximum(
        jnp.dot(w1, xT, preferred_element_type=jnp.float32) + b1, 0.0)   # (64, tile_b)
    # fc2 + relu
    h2 = jnp.maximum(
        jnp.dot(w2, h1, preferred_element_type=jnp.float32) + b2, 0.0)   # (64, tile_b)
    # fc3: width-1 matmul replaced by VPU multiply + cross-sublane (XLU) reduction.
    v = jnp.sum(h2 * w3, axis=0, keepdims=True) + b3                     # (1, tile_b)

    o_ref[...] = v.astype(o_ref.dtype)           # lane-dense, full-width store


def _round_up(n, m):
    return ((n + m - 1) // m) * m


def baseline_network_forward_xt(xT, packed_params, *, target_tile_b=2048,
                                core_parallel=False):
    """Primary entry point: xT is (STATE_SIZE, B) f32 -- batch already on the lane
    axis, so NO wrapper-side transpose/pad pass exists.  Returns a (1, B) f32 row."""
    S, B = xT.shape
    assert S == STATE_SIZE
    assert target_tile_b % 256 == 0, "target_tile_b must be a multiple of 256"

    # Adaptive tile: big enough to amortize per-grid-step overhead, never wildly
    # exceeding B (padded columns would cost full DMA + MXU + store for nothing).
    tile_b = min(target_tile_b, _round_up(B, 256))
    n_tiles = pl.cdiv(B, tile_b)
    b_pad = n_tiles * tile_b        # output padded -> every output block is full

    # "parallel" is fine on 1-TC chips (v5e/v6e); CORE_PARALLEL splits the batch
    # grid across v7x's two TensorCores.
    dim_sem = (pltpu.CORE_PARALLEL,) if core_parallel else ("parallel",)

    out_row = pl.pallas_call(
        baseline_mlp_kernel,
        out_shape=jax.ShapeDtypeStruct((1, b_pad), jnp.float32),
        grid=(n_tiles,),
        in_specs=[
            # Packed parameters: constant block index -> fetched once, resident.
            pl.BlockSpec((HIDDEN, _SLAB_W), lambda i: (0, 0),
                         memory_space=pltpu.VMEM),
            # x tile: batch tiled along the lane axis, double-buffered by Pallas.
            # A non-divisible last tile is a partial block: its garbage tail lanes
            # are lane-independent through the whole net and are sliced off below.
            pl.BlockSpec((STATE_SIZE, tile_b), lambda i: (0, i),
                         memory_space=pltpu.VMEM),
        ],
        out_specs=pl.BlockSpec((1, tile_b), lambda i: (0, i),
                               memory_space=pltpu.VMEM),
        compiler_params=pltpu.CompilerParams(dimension_semantics=dim_sem),
    )(packed_params, xT)

    return out_row[:, :B]


def baseline_network_forward(x, packed_params, *, target_tile_b=2048,
                             core_parallel=False):
    """PyTorch-layout convenience wrapper: x (B, STATE_SIZE) -> (B, 1).

    The `.T` here is pure layout plumbing; producers that can hand x as
    (STATE_SIZE, B) should call `baseline_network_forward_xt` directly."""
    row = baseline_network_forward_xt(x.astype(jnp.float32).T, packed_params,
                                      target_tile_b=target_tile_b,
                                      core_parallel=core_parallel)
    return row.T                                  # (B, 1)


def init_params(key, state_size=STATE_SIZE, hidden=HIDDEN):
    """nn.Linear-style init: W ~ U(-1/sqrt(fan_in), 1/sqrt(fan_in)), (out, in) layout."""
    ks = jax.random.split(key, 6)

    def lin(kw, kb, fan_in, fan_out):
        bound = 1.0 / jnp.sqrt(jnp.float32(fan_in))
        w = jax.random.uniform(kw, (fan_out, fan_in), jnp.float32, -bound, bound)
        b = jax.random.uniform(kb, (fan_out,), jnp.float32, -bound, bound)
        return w, b

    W1, b1 = lin(ks[0], ks[1], state_size, hidden)
    W2, b2 = lin(ks[2], ks[3], hidden, hidden)
    W3, b3 = lin(ks[4], ks[5], hidden, 1)
    return (W1, b1, W2, b2, W3, b3)


def pack_params(params):
    """Pack (W1,b1,W2,b2,W3,b3) into the single (HIDDEN, 128) f32 slab."""
    W1, b1, W2, b2, W3, b3 = params
    slab = jnp.zeros((HIDDEN, _SLAB_W), jnp.float32)
    slab = slab.at[:, 0:STATE_SIZE].set(W1)
    slab = slab.at[:, _COL_B1].set(b1)
    slab = slab.at[:, _COL_B2].set(b2)
    slab = slab.at[:, _COL_W3].set(W3[0])
    slab = slab.at[:, _COL_B3].set(b3[0])        # replicated down column 19
    slab = slab.at[:, _COL_W2:_COL_W2 + HIDDEN].set(W2)
    return slab


def reference_forward(x, params):
    W1, b1, W2, b2, W3, b3 = params
    h1 = jnp.maximum(x @ W1.T + b1, 0.0)
    h2 = jnp.maximum(h1 @ W2.T + b2, 0.0)
    return h2 @ W3.T + b3


if __name__ == "__main__":
    key = jax.random.PRNGKey(0)
    k_params, k_x1, k_x2 = jax.random.split(key, 3)

    params = init_params(k_params)
    slab = pack_params(params)

    # Small primary check (single tile).
    batch = 8
    x = jax.random.normal(k_x1, (batch, STATE_SIZE), jnp.float32)
    out = baseline_network_forward(x, slab)
    out = jax.block_until_ready(out)
    ref = reference_forward(x, params)
    assert out.shape == (batch, 1), out.shape
    assert jnp.allclose(out, ref, atol=1e-4, rtol=1e-4), "mismatch vs reference (small)"

    # Multi-tile + partial-last-tile check (non-divisible batch, 2 grid steps).
    batch2 = 300
    x2 = jax.random.normal(k_x2, (batch2, STATE_SIZE), jnp.float32)
    out2 = baseline_network_forward(x2, slab, target_tile_b=256)
    out2 = jax.block_until_ready(out2)
    ref2 = reference_forward(x2, params)
    assert out2.shape == (batch2, 1), out2.shape
    assert jnp.allclose(out2, ref2, atol=1e-4, rtol=1e-4), "mismatch vs reference (tiled)"

    print("KERNEL_OK")
</pallas_src>

<mosaic_0001>
module attributes {stable_mosaic.version = 11 : i64} {
  func.func @baseline_mlp_kernel(%arg0: i32, %arg1: memref<64x128xf32, #tpu.memory_space<vmem>>, %arg2: memref<16x256xf32, #tpu.memory_space<vmem>>, %arg3: memref<1x256xf32, #tpu.memory_space<vmem>>) attributes {dimension_semantics = [#tpu.dimension_semantics<parallel>], iteration_bounds = array<i64: 1>, scalar_prefetch = 0 : i64, scratch_operands = 0 : i64, tpu.core_type = #tpu.core_type<tc>, window_params = [{pipeline_mode = #tpu.pipeline_mode<synchronous>, transform_indices = @transform_0, window_bounds = array<i64: 64, 128>}, {transform_indices = @transform_1, window_bounds = array<i64: 16, 256>}, {transform_indices = @transform_2, window_bounds = array<i64: 1, 256>}]} {
    %c0 = arith.constant 0 : index
    %c0_0 = arith.constant 0 : index
    %0 = vector.load %arg1[%c0, %c0_0] : memref<64x128xf32, #tpu.memory_space<vmem>>, vector<64x16xf32>
    %c0_1 = arith.constant 0 : index
    %c16 = arith.constant 16 : index
    %1 = vector.load %arg1[%c0_1, %c16] : memref<64x128xf32, #tpu.memory_space<vmem>>, vector<64x1xf32>
    %c0_2 = arith.constant 0 : index
    %c17 = arith.constant 17 : index
    %2 = vector.load %arg1[%c0_2, %c17] : memref<64x128xf32, #tpu.memory_space<vmem>>, vector<64x1xf32>
    %c0_3 = arith.constant 0 : index
    %c18 = arith.constant 18 : index
    %3 = vector.load %arg1[%c0_3, %c18] : memref<64x128xf32, #tpu.memory_space<vmem>>, vector<64x1xf32>
    %c0_4 = arith.constant 0 : index
    %c19 = arith.constant 19 : index
    %4 = vector.load %arg1[%c0_4, %c19] : memref<64x128xf32, #tpu.memory_space<vmem>>, vector<1x1xf32>
    %c0_5 = arith.constant 0 : index
    %c64 = arith.constant 64 : index
    %5 = vector.load %arg1[%c0_5, %c64] : memref<64x128xf32, #tpu.memory_space<vmem>>, vector<64x64xf32>
    %c0_6 = arith.constant 0 : index
    %c0_7 = arith.constant 0 : index
    %6 = vector.load %arg2[%c0_6, %c0_7] : memref<16x256xf32, #tpu.memory_space<vmem>>, vector<16x256xf32>
    %cst = arith.constant dense<0.000000e+00> : vector<64x256xf32>
    %7 = tpu.matmul %0, %6, %cst {dimension_numbers = #tpu.dot_dimension_numbers<[1], [0], [0], [1], [0, 0, 1, 1], [], []>} : vector<64x16xf32>, vector<16x256xf32>, vector<64x256xf32> -> vector<64x256xf32>
    %8 = vector.broadcast %1 : vector<64x1xf32> to vector<64x256xf32>
    %9 = arith.addf %7, %8 : vector<64x256xf32>
    %cst_8 = arith.constant 0.000000e+00 : f32
    %10 = vector.broadcast %cst_8 : f32 to vector<64x256xf32>
    %11 = arith.maximumf %9, %10 : vector<64x256xf32>
    %cst_9 = arith.constant dense<0.000000e+00> : vector<64x256xf32>
    %12 = tpu.matmul %5, %11, %cst_9 {dimension_numbers = #tpu.dot_dimension_numbers<[1], [0], [0], [1], [0, 0, 1, 1], [], []>} : vector<64x64xf32>, vector<64x256xf32>, vector<64x256xf32> -> vector<64x256xf32>
    %13 = vector.broadcast %2 : vector<64x1xf32> to vector<64x256xf32>
    %14 = arith.addf %12, %13 : vector<64x256xf32>
    %cst_10 = arith.constant 0.000000e+00 : f32
    %15 = vector.broadcast %cst_10 : f32 to vector<64x256xf32>
    %16 = arith.maximumf %14, %15 : vector<64x256xf32>
    %17 = vector.broadcast %3 : vector<64x1xf32> to vector<64x256xf32>
    %18 = arith.mulf %16, %17 : vector<64x256xf32>
    %cst_11 = arith.constant dense<0.000000e+00> : vector<256xf32>
    %19 = vector.multi_reduction <add>, %18, %cst_11 [0] : vector<64x256xf32> to vector<256xf32>
    %20 = vector.shape_cast %19 : vector<256xf32> to vector<1x256xf32>
    %21 = vector.broadcast %4 : vector<1x1xf32> to vector<1x256xf32>
    %22 = arith.addf %20, %21 : vector<1x256xf32>
    %c0_12 = arith.constant 0 : index
    %c0_13 = arith.constant 0 : index
    %23 = vector.load %arg3[%c0_12, %c0_13] : memref<1x256xf32, #tpu.memory_space<vmem>>, vector<1x256xf32>
    tpu.vector_store %arg3[%c0_12, %c0_13], %22 {strides = array<i32>} : memref<1x256xf32, #tpu.memory_space<vmem>>, vector<1x256xf32>,
    return
  }
  func.func @transform_0(%arg0: i32) -> (i32, i32) {
    %c0_i32 = arith.constant 0 : i32
    %c0_i32_0 = arith.constant 0 : i32
    %c0_i32_1 = arith.constant 0 : i32
    return %c0_i32, %c0_i32_0 : i32, i32
  }
  func.func @transform_1(%arg0: i32) -> (i32, i32) {
    %c0_i32 = arith.constant 0 : i32
    %c0_i32_0 = arith.constant 0 : i32
    return %c0_i32, %arg0 : i32, i32
  }
  func.func @transform_2(%arg0: i32) -> (i32, i32) {
    %c0_i32 = arith.constant 0 : i32
    %c0_i32_0 = arith.constant 0 : i32
    return %c0_i32, %arg0 : i32, i32
  }
}

</mosaic_0001>

<llo_original>
// kernel: tpu_custom_call.1
$region0: #{tpu_custom_call.1}
  #allocation0 [shape = 'u32[]', space=smem, size = 0x4, offset = 0x4, fixed_abs, tag = 'smem constant byte address 0x4 - core index']
  #allocation1 [shape = 'u32[72,128]{1,0:T(1,128)}', space=vmem, size = 0x9000, scoped, tag = 'internal scratch']
  %s0 = inlined_call_operand.hbm [shape: f32[64,128], index: 0, kind: input, shape index: {}]
  %s1 = inlined_call_operand.vmem [shape: f32[16,8], index: 1, kind: input, shape index: {}]
  %s2 = inlined_call_operand.hbm [shape: f32[1,256], index: 2, kind: output, shape index: {}]
  %s3 = sld [smem:[#allocation0]]
  $region60: #{tpu_custom_call.1} parent=0
    _
  %s5 = ssub.s32 1, %s3
  %s6 = scalar_select 0, %s5, %s3
  $region1: #{tpu_custom_call.1} parent=0
    #allocation2 [shape = 'u8[32768]{0}', space=vmem, size = 0x8000, scoped, tag = 'input window, operand 0, single buffered']
    #allocation3 [shape = 's32[1]{0}', space=sflag, size = 0x4, scoped, tag = 'scoped memory for tpu_custom_call.1']
    #allocation4 [shape = 's32[1]{0}', space=sflag, size = 0x4, scoped, tag = 'scoped memory for tpu_custom_call.1']
    #allocation5 [shape = 'u8[16384]{0}', space=vmem, size = 0x4000, scoped, tag = 'input window, operand 1, single buffered']
    #allocation6 [shape = 'u8[1024]{0}', space=vmem, size = 0x400, scoped, tag = 'output window, operand 0, single buffered']
    %7 = vsyncpa [#allocation3], 0
    %8 = vsyncpa [#allocation4], 0
    // Predicated region
    $region2: #{tpu_custom_call.1} parent=1 // pred_check
      _
    $region3: #{tpu_custom_call.1} parent=1 // pred_check_branch
      %10 = sbr.rel (0) target = $region5
    $region4: #{tpu_custom_call.1} parent=1 // pred_region
      %12 = vsyncadd [#allocation3], 0
      %s13 = sshll.u32 %s0, 4
      %s14 = int_to_ptr.hbm [resolvable:$true] %s13
      %s15 = sshll.u32 [#allocation2], 4
      %s16 = int_to_ptr.vmem [resolvable:$true] %s15
      %21 = dma.hbm_to_vmem [thread:$0]  %s14, 1024, %s16, [#allocation3], 128, 128, 8
    $region5: #{tpu_custom_call.1} parent=1 // pred_fallthru
      _
    // Predicated region
    $region6: #{tpu_custom_call.1} parent=1 // pred_check
      _
    $region7: #{tpu_custom_call.1} parent=1 // pred_check_branch
      %23 = sbr.rel (0) target = $region9
    $region8: #{tpu_custom_call.1} parent=1 // pred_region
      // Predicated region
      $region10: #{tpu_custom_call.1} parent=8 // pred_check
        _
      $region11: #{tpu_custom_call.1} parent=8 // pred_check_branch
        %25 = sbr.rel (0) target = $region13
      $region12: #{tpu_custom_call.1} parent=8 // pred_region
        // Predicated region
        $region14: #{tpu_custom_call.1} parent=12 // pred_check
          _
        $region15: #{tpu_custom_call.1} parent=12 // pred_check_branch
          %27 = sbr.rel (0) target = $region17
        $region16: #{tpu_custom_call.1} parent=12 // pred_region
          // Predicated region
          $region29: #{tpu_custom_call.1} parent=16 // pred_check
            _
          $region30: #{tpu_custom_call.1} parent=16 // pred_check_branch
            %45 = sbr.rel (0) target = $region32
          $region31: #{tpu_custom_call.1} parent=16 // pred_region
            loop: start=0, step=1, limit=1
            $region33: #{tpu_custom_call.1} parent=31 // loop_pre_header
              _
            $region34: #{tpu_custom_call.1} parent=31 // loop_header
              %s47 = sphi 0, %s51
              %p48 = scmp.ge.s32.totalorder %s47, 1
              %s52 = sphi %s1, %s1
              %s53 = sphi [#allocation5], [#allocation5]
            $region35: #{tpu_custom_call.1} parent=31 // loop_header_branch
              %50 = sbr.rel (%p48) target = $region39
            $region36: #{tpu_custom_call.1} parent=31 // loop_body
              %v54 = vld [vmem:[%s52] sm:$0xff]
              %55 = vst [vmem:[%s53] sm:$0xff] %v54
              %v56 = vld [vmem:[%s52 + $0x8] sm:$0xff]
              %57 = vst [vmem:[%s53 + $0x10] sm:$0xff] %v56
            $region37: #{tpu_custom_call.1} parent=31 // loop_footer
              %s51 = sadd.s32 1, %s47
            $region38: #{tpu_custom_call.1} parent=31 // loop_footer_branch
              %46 = sbr.rel target = $region34
            $region39: #{tpu_custom_call.1} parent=31 // loop_exit
              _
          $region32: #{tpu_custom_call.1} parent=16 // pred_fallthru
            _
          // Predicated region
          $region40: #{tpu_custom_call.1} parent=16 // pred_check
            _
          $region41: #{tpu_custom_call.1} parent=16 // pred_check_branch
            %59 = sbr.rel target = $region43
          $region42: #{tpu_custom_call.1} parent=16 // pred_region
            _
          $region43: #{tpu_custom_call.1} parent=16 // pred_fallthru
            _
        $region17: #{tpu_custom_call.1} parent=12 // pred_fallthru
          _
        // Predicated region
        $region18: #{tpu_custom_call.1} parent=12 // pred_check
          _
        $region19: #{tpu_custom_call.1} parent=12 // pred_check_branch
          %29 = sbr.rel target = $region21
        $region20: #{tpu_custom_call.1} parent=12 // pred_region
          %s31 = ssub.s32 256, 1
          loop: start=0, step=1, limit=1
          $region22: #{tpu_custom_call.1} parent=20 // loop_pre_header
            _
          $region23: #{tpu_custom_call.1} parent=20 // loop_header
            %s33 = sphi 0, %s37
            %p34 = scmp.ge.s32.totalorder %s33, 1
            %s38 = sphi %s1, %s1
            %s39 = sphi [#allocation5], [#allocation5]
          $region24: #{tpu_custom_call.1} parent=20 // loop_header_branch
            %36 = sbr.rel (%p34) target = $region28
          $region25: #{tpu_custom_call.1} parent=20 // loop_body
            %v40 = vld [vmem:[%s38] sm:%s31]
            %41 = vst [vmem:[%s39] sm:%s31] %v40
            %v42 = vld [vmem:[%s38 + $0x8] sm:%s31]
            %43 = vst [vmem:[%s39 + $0x10] sm:%s31] %v42
          $region26: #{tpu_custom_call.1} parent=20 // loop_footer
            %s37 = sadd.s32 1, %s33
          $region27: #{tpu_custom_call.1} parent=20 // loop_footer_branch
            %32 = sbr.rel target = $region23
          $region28: #{tpu_custom_call.1} parent=20 // loop_exit
            _
        $region21: #{tpu_custom_call.1} parent=12 // pred_fallthru
          _
      $region13: #{tpu_custom_call.1} parent=8 // pred_fallthru
        _
      %60 = vnop
    $region9: #{tpu_custom_call.1} parent=1 // pred_fallthru
      _
    // Predicated region
    $region44: #{tpu_custom_call.1} parent=1 // pred_check
      _
    $region45: #{tpu_custom_call.1} parent=1 // pred_check_branch
      %62 = sbr.rel (0) target = $region47
    $region46: #{tpu_custom_call.1} parent=1 // pred_region
      %64 = dma.done [#allocation3], 1024
    $region47: #{tpu_custom_call.1} parent=1 // pred_fallthru
      _
    // Predicated region
    $region48: #{tpu_custom_call.1} parent=1 // pred_check
      _
    $region49: #{tpu_custom_call.1} parent=1 // pred_check_branch
      %66 = sbr.rel (0) target = $region51
    $region50: #{tpu_custom_call.1} parent=1 // pred_region
      _
    $region51: #{tpu_custom_call.1} parent=1 // pred_fallthru
      _
    %v67 = vld [vmem:[#allocation2] sm:$0xff]
    %v68 = vld [vmem:[#allocation2 + $0x8] sm:$0xff]
    %v69 = vld [vmem:[#allocation2 + $0x10] sm:$0xff]
    %v70 = vld [vmem:[#allocation2 + $0x18] sm:$0xff]
    %v71 = vld [vmem:[#allocation2 + $0x20] sm:$0xff]
    %v72 = vld [vmem:[#allocation2 + $0x28] sm:$0xff]
    %v73 = vld [vmem:[#allocation2 + $0x30] sm:$0xff]
    %v74 = vld [vmem:[#allocation2 + $0x38] sm:$0xff]
    %v75 = vld [vmem:[#allocation2] sm:$0x1]
    %v76 = vld [vmem:[#allocation5] sm:$0xff]
    %v77 = vld [vmem:[#allocation5 + $0x8] sm:$0xff]
    %v78 = vld [vmem:[#allocation5 + $0x10] sm:$0xff]
    %v79 = vld [vmem:[#allocation5 + $0x18] sm:$0xff]
    %81 = vset.pattern.permute.xlu0 16
    %82 = vperm.xlu0 %81, %v67
    %v83 = vpop.permute.xlu0 %82
    %86 = vset.pattern.permute.xlu0 16
    %87 = vperm.xlu0 %86, %v68
    %v88 = vpop.permute.xlu0 %87
    %91 = vset.pattern.permute.xlu0 16
    %92 = vperm.xlu0 %91, %v69
    %v93 = vpop.permute.xlu0 %92
    %96 = vset.pattern.permute.xlu0 16
    %97 = vperm.xlu0 %96, %v70
    %v98 = vpop.permute.xlu0 %97
    %101 = vset.pattern.permute.xlu0 16
    %102 = vperm.xlu0 %101, %v71
    %v103 = vpop.permute.xlu0 %102
    %106 = vset.pattern.permute.xlu0 16
    %107 = vperm.xlu0 %106, %v72
    %v108 = vpop.permute.xlu0 %107
    %111 = vset.pattern.permute.xlu0 16
    %112 = vperm.xlu0 %111, %v73
    %v113 = vpop.permute.xlu0 %112
    %116 = vset.pattern.permute.xlu0 16
    %117 = vperm.xlu0 %116, %v74
    %v118 = vpop.permute.xlu0 %117
    %vm120 = vcmask 130048
    %v121 = vsel %vm120, %v67, 0
    %v123 = vsel %vm120, %v68, 0
    %v125 = vsel %vm120, %v69, 0
    %v127 = vsel %vm120, %v70, 0
    %v129 = vsel %vm120, %v71, 0
    %v131 = vsel %vm120, %v72, 0
    %v133 = vsel %vm120, %v73, 0
    %v135 = vsel %vm120, %v74, 0
    %137 = vmatpush.msra.mxu0 0.0
    %138 = vmatpush.msra.mxu0 0.0
    %139 = vmatpush.msra.mxu0 0.0
    %140 = vmatpush.msra.mxu0 0.0
    %141 = vmatpush.msra.mxu0 0.0
    %142 = vmatpush.msra.mxu0 0.0
    %143 = vmatpush.msra.mxu0 0.0
    %144 = vmatpush.msra.mxu0 0.0
    %145 = vmatpush.msra.mxu0 0.0
    %146 = vmatpush.msra.mxu0 0.0
    %147 = vmatpush.msra.mxu0 0.0
    %148 = vmatpush.msra.mxu0 0.0
    %149 = vmatpush.msra.mxu0 0.0
    %150 = vmatpush.msra.mxu0 0.0
    %151 = vmatpush.msra.mxu0 %v78
    %152 = vmatpush.msra.mxu0 %v76
    %153 = vmatmul.f32.gmra.mxu0 %v121
    %v154 = vpop.f32.mrf.mxu0
    %v155 = vadd.f32 %v83, %v154
    %156 = vmatmul.f32.gmra.mxu0 %v123
    %v157 = vpop.f32.mrf.mxu0
    %v158 = vadd.f32 %v88, %v157
    %159 = vmatmul.f32.gmra.mxu0 %v125
    %v160 = vpop.f32.mrf.mxu0
    %v161 = vadd.f32 %v93, %v160
    %162 = vmatmul.f32.gmra.mxu0 %v127
    %v163 = vpop.f32.mrf.mxu0
    %v164 = vadd.f32 %v98, %v163
    %165 = vmatmul.f32.gmra.mxu0 %v129
    %v166 = vpop.f32.mrf.mxu0
    %v167 = vadd.f32 %v103, %v166
    %168 = vmatmul.f32.gmra.mxu0 %v131
    %v169 = vpop.f32.mrf.mxu0
    %v170 = vadd.f32 %v108, %v169
    %171 = vmatmul.f32.gmra.mxu0 %v133
    %v172 = vpop.f32.mrf.mxu0
    %v173 = vadd.f32 %v113, %v172
    %174 = vmatmul.f32.gmra.mxu0 %v135
    %v175 = vpop.f32.mrf.mxu0
    %v176 = vadd.f32 %v118, %v175
    %177 = vdwg.mxu0
    %178 = vmatpush.msra.mxu0 0.0
    %179 = vmatpush.msra.mxu0 0.0
    %180 = vmatpush.msra.mxu0 0.0
    %181 = vmatpush.msra.mxu0 0.0
    %182 = vmatpush.msra.mxu0 0.0
    %183 = vmatpush.msra.mxu0 0.0
    %184 = vmatpush.msra.mxu0 0.0
    %185 = vmatpush.msra.mxu0 0.0
    %186 = vmatpush.msra.mxu0 0.0
    %187 = vmatpush.msra.mxu0 0.0
    %188 = vmatpush.msra.mxu0 0.0
    %189 = vmatpush.msra.mxu0 0.0
    %190 = vmatpush.msra.mxu0 0.0
    %191 = vmatpush.msra.mxu0 0.0
    %192 = vmatpush.msra.mxu0 %v79
    %193 = vmatpush.msra.mxu0 %v77
    %194 = vmatmul.f32.gmra.mxu0 %v121
    %v195 = vpop.f32.mrf.mxu0
    %v196 = vadd.f32 %v83, %v195
    %197 = vmatmul.f32.gmra.mxu0 %v123
    %v198 = vpop.f32.mrf.mxu0
    %v199 = vadd.f32 %v88, %v198
    %200 = vmatmul.f32.gmra.mxu0 %v125
    %v201 = vpop.f32.mrf.mxu0
    %v202 = vadd.f32 %v93, %v201
    %203 = vmatmul.f32.gmra.mxu0 %v127
    %v204 = vpop.f32.mrf.mxu0
    %v205 = vadd.f32 %v98, %v204
    %206 = vmatmul.f32.gmra.mxu0 %v129
    %v207 = vpop.f32.mrf.mxu0
    %v208 = vadd.f32 %v103, %v207
    %209 = vmatmul.f32.gmra.mxu0 %v131
    %v210 = vpop.f32.mrf.mxu0
    %v211 = vadd.f32 %v108, %v210
    %212 = vmatmul.f32.gmra.mxu0 %v133
    %v213 = vpop.f32.mrf.mxu0
    %v214 = vadd.f32 %v113, %v213
    %215 = vmatmul.f32.gmra.mxu0 %v135
    %v216 = vpop.f32.mrf.mxu0
    %v217 = vadd.f32 %v118, %v216
    %218 = vdwg.mxu0
    %v219 = vmax.f32 %v155, 0.0
    %v220 = vmax.f32 %v196, 0.0
    %v221 = vmax.f32 %v158, 0.0
    %v222 = vmax.f32 %v199, 0.0
    %v223 = vmax.f32 %v161, 0.0
    %v224 = vmax.f32 %v202, 0.0
    %v225 = vmax.f32 %v164, 0.0
    %v226 = vmax.f32 %v205, 0.0
    %v227 = vmax.f32 %v167, 0.0
    %v228 = vmax.f32 %v208, 0.0
    %v229 = vmax.f32 %v170, 0.0
    %v230 = vmax.f32 %v211, 0.0
    %v231 = vmax.f32 %v173, 0.0
    %v232 = vmax.f32 %v214, 0.0
    %v233 = vmax.f32 %v176, 0.0
    %v234 = vmax.f32 %v217, 0.0
    %235 = vset.pattern.permute.xlu0 17
    %236 = vperm.xlu0 %235, %v67
    %v237 = vpop.permute.xlu0 %236
    %239 = vset.pattern.permute.xlu0 17
    %240 = vperm.xlu0 %239, %v68
    %v241 = vpop.permute.xlu0 %240
    %243 = vset.pattern.permute.xlu0 17
    %244 = vperm.xlu0 %243, %v69
    %v245 = vpop.permute.xlu0 %244
    %247 = vset.pattern.permute.xlu0 17
    %248 = vperm.xlu0 %247, %v70
    %v249 = vpop.permute.xlu0 %248
    %251 = vset.pattern.permute.xlu0 17
    %252 = vperm.xlu0 %251, %v71
    %v253 = vpop.permute.xlu0 %252
    %255 = vset.pattern.permute.xlu0 17
    %256 = vperm.xlu0 %255, %v72
    %v257 = vpop.permute.xlu0 %256
    %259 = vset.pattern.permute.xlu0 17
    %260 = vperm.xlu0 %259, %v73
    %v261 = vpop.permute.xlu0 %260
    %263 = vset.pattern.permute.xlu0 17
    %264 = vperm.xlu0 %263, %v74
    %v265 = vpop.permute.xlu0 %264
    %267 = vrot.lane.b32.xlu0 %v67, 64
    %v268 = vpop.permute.xlu0 %267
    %269 = vrot.lane.b32.xlu0 %v68, 64
    %v270 = vpop.permute.xlu0 %269
    %271 = vrot.lane.b32.xlu0 %v69, 64
    %v272 = vpop.permute.xlu0 %271
    %273 = vrot.lane.b32.xlu0 %v70, 64
    %v274 = vpop.permute.xlu0 %273
    %275 = vrot.lane.b32.xlu0 %v71, 64
    %v276 = vpop.permute.xlu0 %275
    %277 = vrot.lane.b32.xlu0 %v72, 64
    %v278 = vpop.permute.xlu0 %277
    %279 = vrot.lane.b32.xlu0 %v73, 64
    %v280 = vpop.permute.xlu0 %279
    %281 = vrot.lane.b32.xlu0 %v74, 64
    %v282 = vpop.permute.xlu0 %281
    %vm283 = vcmask 523264
    %v284 = vsel %vm283, %v268, 0
    %v286 = vsel %vm283, %v270, 0
    %v288 = vsel %vm283, %v272, 0
    %v290 = vsel %vm283, %v274, 0
    %v292 = vsel %vm283, %v276, 0
    %v294 = vsel %vm283, %v278, 0
    %v296 = vsel %vm283, %v280, 0
    %v298 = vsel %vm283, %v282, 0
    %300 = vmatpush.msra.mxu0 0.0
    %301 = vmatpush.msra.mxu0 0.0
    %302 = vmatpush.msra.mxu0 0.0
    %303 = vmatpush.msra.mxu0 0.0
    %304 = vmatpush.msra.mxu0 0.0
    %305 = vmatpush.msra.mxu0 0.0
    %306 = vmatpush.msra.mxu0 0.0
    %307 = vmatpush.msra.mxu0 0.0
    %308 = vmatpush.msra.mxu0 %v233
    %309 = vmatpush.msra.mxu0 %v231
    %310 = vmatpush.msra.mxu0 %v229
    %311 = vmatpush.msra.mxu0 %v227
    %312 = vmatpush.msra.mxu0 %v225
    %313 = vmatpush.msra.mxu0 %v223
    %314 = vmatpush.msra.mxu0 %v221
    %315 = vmatpush.msra.mxu0 %v219
    %316 = vmatmul.f32.gmra.mxu0 %v284
    %v317 = vpop.f32.mrf.mxu0
    %v318 = vadd.f32 %v237, %v317
    %319 = vmatmul.f32.gmra.mxu0 %v286
    %v320 = vpop.f32.mrf.mxu0
    %v321 = vadd.f32 %v241, %v320
    %322 = vmatmul.f32.gmra.mxu0 %v288
    %v323 = vpop.f32.mrf.mxu0
    %v324 = vadd.f32 %v245, %v323
    %325 = vmatmul.f32.gmra.mxu0 %v290
    %v326 = vpop.f32.mrf.mxu0
    %v327 = vadd.f32 %v249, %v326
    %328 = vmatmul.f32.gmra.mxu0 %v292
    %v329 = vpop.f32.mrf.mxu0
    %v330 = vadd.f32 %v253, %v329
    %331 = vmatmul.f32.gmra.mxu0 %v294
    %v332 = vpop.f32.mrf.mxu0
    %v333 = vadd.f32 %v257, %v332
    %334 = vmatmul.f32.gmra.mxu0 %v296
    %v335 = vpop.f32.mrf.mxu0
    %v336 = vadd.f32 %v261, %v335
    %337 = vmatmul.f32.gmra.mxu0 %v298
    %v338 = vpop.f32.mrf.mxu0
    %v339 = vadd.f32 %v265, %v338
    %340 = vdwg.mxu0
    %341 = vmatpush.msra.mxu0 0.0
    %342 = vmatpush.msra.mxu0 0.0
    %343 = vmatpush.msra.mxu0 0.0
    %344 = vmatpush.msra.mxu0 0.0
    %345 = vmatpush.msra.mxu0 0.0
    %346 = vmatpush.msra.mxu0 0.0
    %347 = vmatpush.msra.mxu0 0.0
    %348 = vmatpush.msra.mxu0 0.0
    %349 = vmatpush.msra.mxu0 %v234
    %350 = vmatpush.msra.mxu0 %v232
    %351 = vmatpush.msra.mxu0 %v230
    %352 = vmatpush.msra.mxu0 %v228
    %353 = vmatpush.msra.mxu0 %v226
    %354 = vmatpush.msra.mxu0 %v224
    %355 = vmatpush.msra.mxu0 %v222
    %356 = vmatpush.msra.mxu0 %v220
    %357 = vmatmul.f32.gmra.mxu0 %v284
    %v358 = vpop.f32.mrf.mxu0
    %v359 = vadd.f32 %v237, %v358
    %360 = vmatmul.f32.gmra.mxu0 %v286
    %v361 = vpop.f32.mrf.mxu0
    %v362 = vadd.f32 %v241, %v361
    %363 = vmatmul.f32.gmra.mxu0 %v288
    %v364 = vpop.f32.mrf.mxu0
    %v365 = vadd.f32 %v245, %v364
    %366 = vmatmul.f32.gmra.mxu0 %v290
    %v367 = vpop.f32.mrf.mxu0
    %v368 = vadd.f32 %v249, %v367
    %369 = vmatmul.f32.gmra.mxu0 %v292
    %v370 = vpop.f32.mrf.mxu0
    %v371 = vadd.f32 %v253, %v370
    %372 = vmatmul.f32.gmra.mxu0 %v294
    %v373 = vpop.f32.mrf.mxu0
    %v374 = vadd.f32 %v257, %v373
    %375 = vmatmul.f32.gmra.mxu0 %v296
    %v376 = vpop.f32.mrf.mxu0
    %v377 = vadd.f32 %v261, %v376
    %378 = vmatmul.f32.gmra.mxu0 %v298
    %v379 = vpop.f32.mrf.mxu0
    %v380 = vadd.f32 %v265, %v379
    %381 = vdwg.mxu0
    %v382 = vmax.f32 %v318, 0.0
    %v383 = vmax.f32 %v359, 0.0
    %v384 = vmax.f32 %v321, 0.0
    %v385 = vmax.f32 %v362, 0.0
    %v386 = vmax.f32 %v324, 0.0
    %v387 = vmax.f32 %v365, 0.0
    %v388 = vmax.f32 %v327, 0.0
    %v389 = vmax.f32 %v368, 0.0
    %v390 = vmax.f32 %v330, 0.0
    %v391 = vmax.f32 %v371, 0.0
    %v392 = vmax.f32 %v333, 0.0
    %v393 = vmax.f32 %v374, 0.0
    %v394 = vmax.f32 %v336, 0.0
    %v395 = vmax.f32 %v377, 0.0
    %v396 = vmax.f32 %v339, 0.0
    %v397 = vmax.f32 %v380, 0.0
    %398 = vset.pattern.permute.xlu0 18
    %399 = vperm.xlu0 %398, %v67
    %v400 = vpop.permute.xlu0 %399
    %402 = vset.pattern.permute.xlu0 18
    %403 = vperm.xlu0 %402, %v68
    %v404 = vpop.permute.xlu0 %403
    %406 = vset.pattern.permute.xlu0 18
    %407 = vperm.xlu0 %406, %v69
    %v408 = vpop.permute.xlu0 %407
    %410 = vset.pattern.permute.xlu0 18
    %411 = vperm.xlu0 %410, %v70
    %v412 = vpop.permute.xlu0 %411
    %414 = vset.pattern.permute.xlu0 18
    %415 = vperm.xlu0 %414, %v71
    %v416 = vpop.permute.xlu0 %415
    %418 = vset.pattern.permute.xlu0 18
    %419 = vperm.xlu0 %418, %v72
    %v420 = vpop.permute.xlu0 %419
    %422 = vset.pattern.permute.xlu0 18
    %423 = vperm.xlu0 %422, %v73
    %v424 = vpop.permute.xlu0 %423
    %426 = vset.pattern.permute.xlu0 18
    %427 = vperm.xlu0 %426, %v74
    %v428 = vpop.permute.xlu0 %427
    %v430 = vmul.f32 %v382, %v400
    %v431 = vmul.f32 %v383, %v400
    %v432 = vmul.f32 %v384, %v404
    %v433 = vmul.f32 %v385, %v404
    %v434 = vmul.f32 %v386, %v408
    %v435 = vmul.f32 %v387, %v408
    %v436 = vmul.f32 %v388, %v412
    %v437 = vmul.f32 %v389, %v412
    %v438 = vmul.f32 %v390, %v416
    %v439 = vmul.f32 %v391, %v416
    %v440 = vmul.f32 %v392, %v420
    %v441 = vmul.f32 %v393, %v420
    %v442 = vmul.f32 %v394, %v424
    %v443 = vmul.f32 %v395, %v424
    %v444 = vmul.f32 %v396, %v428
    %v445 = vmul.f32 %v397, %v428
    %v446 = vadd.f32 %v430, %v432
    %v447 = vadd.f32 %v446, %v434
    %v448 = vadd.f32 %v447, %v436
    %v449 = vadd.f32 %v448, %v438
    %v450 = vadd.f32 %v449, %v440
    %v451 = vadd.f32 %v450, %v442
    %v452 = vadd.f32 %v451, %v444
    %v453 = vrot.slane %v452, 4
    %v454 = vadd.f32 %v452, %v453
    %v455 = vrot.slane %v454, 2
    %v456 = vadd.f32 %v454, %v455
    %v457 = vrot.slane %v456, 1
    %v458 = vadd.f32 %v456, %v457
    %v459 = vadd.f32 %v431, %v433
    %v460 = vadd.f32 %v459, %v435
    %v461 = vadd.f32 %v460, %v437
    %v462 = vadd.f32 %v461, %v439
    %v463 = vadd.f32 %v462, %v441
    %v464 = vadd.f32 %v463, %v443
    %v465 = vadd.f32 %v464, %v445
    %v466 = vrot.slane %v465, 4
    %v467 = vadd.f32 %v465, %v466
    %v468 = vrot.slane %v467, 2
    %v469 = vadd.f32 %v467, %v468
    %v470 = vrot.slane %v469, 1
    %v471 = vadd.f32 %v469, %v470
    %473 = vset.pattern.permute.xlu0 19
    %474 = vperm.xlu0 %473, %v75
    %v475 = vpop.permute.xlu0 %474
    %v477 = vadd.f32 %v458, %v475
    %v478 = vadd.f32 %v471, %v475
    %v481 = vrot.slane %v478, 7
    %vm482 = vcmask 1040384
    %v483 = vsel %vm482, %v477, %v481
    %v485 = vlaneseq
    %vm486 = vcmp.ge.s32.totalorder %v485, 0
    %vm487 = vcmp.lt.s32.totalorder %v485, 256
    %vm488 = vmand %vm486, %vm487
    %489 = vst.msk [vmem:[#allocation6] sm:$0x3] %vm488, %v483
    // Predicated region
    $region52: #{tpu_custom_call.1} parent=1 // pred_check
      _
    $region53: #{tpu_custom_call.1} parent=1 // pred_check_branch
      %491 = sbr.rel (0) target = $region55
    $region54: #{tpu_custom_call.1} parent=1 // pred_region
      %493 = vsyncadd [#allocation4], 0
      %s495 = sshll.u32 [#allocation6], 4
      %s496 = int_to_ptr.vmem [resolvable:$true] %s495
      %s497 = sshll.u32 %s2, 4
      %s498 = int_to_ptr.hbm [resolvable:$true] %s497
      %500 = dma.vmem_to_hbm [thread:$0]  %s496, 32, %s498, [#allocation4]
    $region55: #{tpu_custom_call.1} parent=1 // pred_fallthru
      _
    // Predicated region
    $region56: #{tpu_custom_call.1} parent=1 // pred_check
      _
    $region57: #{tpu_custom_call.1} parent=1 // pred_check_branch
      %502 = sbr.rel (0) target = $region59
    $region58: #{tpu_custom_call.1} parent=1 // pred_region
      %504 = dma.done [#allocation4], 32
    $region59: #{tpu_custom_call.1} parent=1 // pred_fallthru
      _
    %505 = vsyncpa [#allocation3], 1
    %506 = vsyncpa [#allocation4], 1

</llo_original>
